<compile_context>
chip_gen: v6e
topology: v6e:2x2x1
jax: 0.10.0
libtpu: 0.0.40
codegen_flags: <defaults>
</compile_context>

<pallas_src>
import jax
import jax.numpy as jnp
from jax.experimental import pallas as pl
from jax.experimental.pallas import tpu as pltpu

_NEG_BIG = -1e30


def _ce_partial_kernel(logits_ref, target_ref, out_ref):
    """Per-tile sum of cross-entropy, broadcast into a lane-dense (1, 8, 128) block."""
    x = logits_ref[...].astype(jnp.float32)          # (TM, Cp), f32 accumulation
    t = target_ref[...]                               # (TM, 1) int32
    tm, cp = x.shape

    m = jnp.max(x, axis=-1, keepdims=True)
    # TODO(synk): on v6e/v7x the exp/sum could run in bf16 for EUP throughput; kept f32 for v5e safety.
    lse = jnp.log(jnp.sum(jnp.exp(x - m), axis=-1, keepdims=True)) + m

    cols = jax.lax.broadcasted_iota(jnp.int32, (tm, cp), 1)
    tgt_logit = jnp.sum(jnp.where(cols == t, x, 0.0), axis=-1, keepdims=True)

    ce_sum = jnp.sum(lse - tgt_logit)                  # scalar partial sum for this tile
    out_ref[...] = jnp.broadcast_to(ce_sum, out_ref.shape)


def focal_loss(logits, targets, gamma=0.0, alpha=1.0, block_rows=512):
    """logits: (N, C) float (f32 or bf16), targets: (N,) int class ids. Returns scalar f32."""
    n, c = logits.shape
    itemsize = jnp.dtype(logits.dtype).itemsize

    # Lane-dense class axis: pad C up to a multiple of 128 with a large negative.
    cp = ((c + 127) // 128) * 128
    if cp != c:
        logits = jnp.pad(logits, ((0, 0), (0, cp - c)), constant_values=_NEG_BIG)

    # Row tile: multiple of 8, sized to stay well inside v7x VMEM (2 inputs x 2 buffers).
    tm = min(block_rows, ((n + 7) // 8) * 8)
    tm = max(8, (tm // 8) * 8)
    vmem_budget = 40 << 20
    while tm > 8 and 2 * tm * (cp * itemsize + 128 * 4) > vmem_budget:
        tm //= 2
    tm = max(8, (tm // 8) * 8)

    # Pad the batch to a multiple of tm with rows whose CE is exactly 0.
    t2d = targets.astype(jnp.int32).reshape(n, 1)
    n_pad = ((n + tm - 1) // tm) * tm
    if n_pad != n:
        pad = n_pad - n
        pad_logits = jnp.full((pad, cp), _NEG_BIG, logits.dtype).at[:, 0].set(0)
        logits = jnp.concatenate([logits, pad_logits], axis=0)
        t2d = jnp.concatenate([t2d, jnp.zeros((pad, 1), jnp.int32)], axis=0)
    num_tiles = n_pad // tm

    # Lift v5e's 16 MiB scoped-VMEM default when the tile needs it; cap below v7x physical.
    vmem_needed = 2 * tm * (cp * itemsize + 128 * 4) + (1 << 20)
    vmem_limit = int(min(max(vmem_needed, 16 << 20), 48 << 20))

    partials = pl.pallas_call(
        _ce_partial_kernel,
        out_shape=jax.ShapeDtypeStruct((num_tiles, 8, 128), jnp.float32),
        grid_spec=pltpu.PrefetchScalarGridSpec(
            num_scalar_prefetch=0,
            grid=(num_tiles,),
            in_specs=[
                pl.BlockSpec((tm, cp), lambda i: (i, 0)),
                pl.BlockSpec((tm, 1), lambda i: (i, 0)),
            ],
            out_specs=pl.BlockSpec((1, 8, 128), lambda i: (i, 0, 0)),
        ),
        compiler_params=pltpu.CompilerParams(
            dimension_semantics=("parallel",),
            vmem_limit_bytes=vmem_limit,
        ),
    )(logits, t2d)

    # Mean over the TRUE batch size + scalar focal transform (outside the kernel).
    logp = jnp.sum(partials[:, 0, 0]) / jnp.float32(n)
    p = jnp.exp(-logp)
    one_minus_p = jnp.maximum(1.0 - p, 0.0)            # guard NaN for non-integer gamma
    return jnp.float32(alpha) * (one_minus_p ** jnp.float32(gamma)) * logp


def _focal_loss_ref(logits, targets, gamma=0.0, alpha=1.0):
    """Pure-JAX reference mirroring the PyTorch forward."""
    logits = logits.astype(jnp.float32)
    lse = jax.scipy.special.logsumexp(logits, axis=-1)
    tgt = jnp.take_along_axis(logits, targets[:, None].astype(jnp.int32), axis=-1)[:, 0]
    logp = jnp.mean(lse - tgt)                          # CrossEntropyLoss (mean)
    p = jnp.exp(-logp)
    return alpha * (1.0 - p) ** gamma * logp


if __name__ == "__main__":
    key = jax.random.PRNGKey(0)
    k1, k2, k3, k4 = jax.random.split(key, 4)

    # Case 1: small batch, C=32 (padded to 128 lanes), single tile.
    N1, C1 = 8, 32
    logits1 = jax.random.normal(k1, (N1, C1), dtype=jnp.float32)
    targets1 = jax.random.randint(k2, (N1,), 0, C1, dtype=jnp.int32)

    # Case 2: batch not a multiple of the row tile -> exercises row padding + multi-tile grid.
    N2, C2 = 20, 160
    logits2 = jax.random.normal(k3, (N2, C2), dtype=jnp.float32)
    targets2 = jax.random.randint(k4, (N2,), 0, C2, dtype=jnp.int32)

    for lg, tg, br in [(logits1, targets1, 512), (logits2, targets2, 8)]:
        for gamma, alpha in [(0.0, 1.0), (2.0, 0.25)]:
            out = jax.block_until_ready(
                focal_loss(lg, tg, gamma=gamma, alpha=alpha, block_rows=br))
            ref = _focal_loss_ref(lg, tg, gamma=gamma, alpha=alpha)
            assert jnp.allclose(out, ref, rtol=1e-5, atol=1e-5), (gamma, alpha, out, ref)

    # bf16 logits in HBM (kernel accumulates in f32).
    out_bf16 = jax.block_until_ready(
        focal_loss(logits1.astype(jnp.bfloat16), targets1, gamma=2.0, alpha=0.25))
    ref_bf16 = _focal_loss_ref(logits1.astype(jnp.bfloat16), targets1, gamma=2.0, alpha=0.25)
    assert jnp.allclose(out_bf16, ref_bf16, rtol=1e-4, atol=1e-4), (out_bf16, ref_bf16)

    print("KERNEL_OK")
</pallas_src>

<mosaic_0001>
module attributes {stable_mosaic.version = 11 : i64} {
  func.func @_ce_partial_kernel(%arg0: i32, %arg1: memref<8x128xf32, #tpu.memory_space<vmem>>, %arg2: memref<8x1xi32, #tpu.memory_space<vmem>>, %arg3: memref<1x8x128xf32, #tpu.memory_space<vmem>>) attributes {dimension_semantics = [#tpu.dimension_semantics<parallel>], iteration_bounds = array<i64: 1>, scalar_prefetch = 0 : i64, scratch_operands = 0 : i64, tpu.core_type = #tpu.core_type<tc>, window_params = [{transform_indices = @transform_0, window_bounds = array<i64: 8, 128>}, {transform_indices = @transform_1, window_bounds = array<i64: 8, 1>}, {transform_indices = @transform_2, window_bounds = array<i64: 1, 8, 128>}]} {
    %c0 = arith.constant 0 : index
    %c0_0 = arith.constant 0 : index
    %0 = vector.load %arg1[%c0, %c0_0] : memref<8x128xf32, #tpu.memory_space<vmem>>, vector<8x128xf32>
    %c0_1 = arith.constant 0 : index
    %c0_2 = arith.constant 0 : index
    %1 = vector.load %arg2[%c0_1, %c0_2] : memref<8x1xi32, #tpu.memory_space<vmem>>, vector<8x1xi32>
    %cst = arith.constant dense<0xFF800000> : vector<8xf32>
    %2 = vector.multi_reduction <maximumf>, %0, %cst [1] : vector<8x128xf32> to vector<8xf32>
    %3 = vector.shape_cast %2 : vector<8xf32> to vector<8x1xf32>
    %4 = vector.broadcast %3 : vector<8x1xf32> to vector<8x128xf32>
    %5 = arith.subf %0, %4 : vector<8x128xf32>
    %6 = math.exp %5 : vector<8x128xf32>
    %cst_3 = arith.constant dense<0.000000e+00> : vector<8xf32>
    %7 = vector.multi_reduction <add>, %6, %cst_3 [1] : vector<8x128xf32> to vector<8xf32>
    %8 = vector.shape_cast %7 : vector<8xf32> to vector<8x1xf32>
    %9 = math.log %8 : vector<8x1xf32>
    %10 = arith.addf %9, %3 : vector<8x1xf32>
    %11 = tpu.iota {dimensions = array<i32: 1>} : vector<8x128xi32>
    %12 = vector.broadcast %1 : vector<8x1xi32> to vector<8x128xi32>
    %13 = arith.cmpi eq, %11, %12 : vector<8x128xi32>
    %cst_4 = arith.constant 0.000000e+00 : f32
    %14 = vector.broadcast %cst_4 : f32 to vector<8x128xf32>
    %15 = arith.select %13, %0, %14 : vector<8x128xi1>, vector<8x128xf32>
    %cst_5 = arith.constant dense<0.000000e+00> : vector<8xf32>
    %16 = vector.multi_reduction <add>, %15, %cst_5 [1] : vector<8x128xf32> to vector<8xf32>
    %17 = vector.shape_cast %16 : vector<8xf32> to vector<8x1xf32>
    %18 = arith.subf %10, %17 : vector<8x1xf32>
    %19 = vector.shape_cast %18 : vector<8x1xf32> to vector<1x8x1xf32>
    %cst_6 = arith.constant dense<0.000000e+00> : vector<1xf32>
    %20 = vector.multi_reduction <add>, %19, %cst_6 [1, 2] : vector<1x8x1xf32> to vector<1xf32>
    %21 = vector.shape_cast %20 : vector<1xf32> to vector<1x1x1xf32>
    %22 = vector.extract %21[0, 0, 0] : f32 from vector<1x1x1xf32>
    %23 = vector.broadcast %22 : f32 to vector<1x8x128xf32>
    %c0_7 = arith.constant 0 : index
    %c0_8 = arith.constant 0 : index
    %c0_9 = arith.constant 0 : index
    %24 = vector.load %arg3[%c0_7, %c0_8, %c0_9] : memref<1x8x128xf32, #tpu.memory_space<vmem>>, vector<1x8x128xf32>
    tpu.vector_store %arg3[%c0_7, %c0_8, %c0_9], %23 {strides = array<i32>} : memref<1x8x128xf32, #tpu.memory_space<vmem>>, vector<1x8x128xf32>,
    return
  }
  func.func @transform_0(%arg0: i32) -> (i32, i32) {
    %c0_i32 = arith.constant 0 : i32
    %c0_i32_0 = arith.constant 0 : i32
    return %arg0, %c0_i32 : i32, i32
  }
  func.func @transform_1(%arg0: i32) -> (i32, i32) {
    %c0_i32 = arith.constant 0 : i32
    %c0_i32_0 = arith.constant 0 : i32
    return %arg0, %c0_i32 : i32, i32
  }
  func.func @transform_2(%arg0: i32) -> (i32, i32, i32) {
    %c0_i32 = arith.constant 0 : i32
    %c0_i32_0 = arith.constant 0 : i32
    %c0_i32_1 = arith.constant 0 : i32
    return %arg0, %c0_i32, %c0_i32_0 : i32, i32, i32
  }
}

</mosaic_0001>

<llo_original>
// kernel: tpu_custom_call.1
$region0: #{tpu_custom_call.1}
  #allocation0 [shape = 'u32[]', space=smem, size = 0x4, offset = 0x4, fixed_abs, tag = 'smem constant byte address 0x4 - core index']
  #allocation1 [shape = 'u32[144,128]{1,0:T(1,128)}', space=vmem, size = 0x12000, scoped, tag = 'internal scratch']
  %s0 = inlined_call_operand.vmem [shape: f32[8,128], index: 0, kind: input, shape index: {}]
  %s1 = inlined_call_operand.vmem [shape: s32[8,1], index: 1, kind: input, shape index: {}]
  %s2 = inlined_call_operand.hbm [shape: f32[1,8,128], index: 2, kind: output, shape index: {}]
  %s3 = sld [smem:[#allocation0]]
  $region18: #{tpu_custom_call.1} parent=0
    _
  %s5 = ssub.s32 1, %s3
  %s6 = scalar_select 0, %s5, %s3
  $region1: #{tpu_custom_call.1} parent=0
    #allocation2 [shape = 'u8[4096]{0}', space=vmem, size = 0x1000, scoped, tag = 'output window, operand 0, single buffered']
    #allocation3 [shape = 's32[1]{0}', space=sflag, size = 0x4, scoped, tag = 'scoped memory for tpu_custom_call.1']
    %7 = vsyncpa [#allocation3], 0
    // Predicated region
    $region2: #{tpu_custom_call.1} parent=1 // pred_check
      _
    $region3: #{tpu_custom_call.1} parent=1 // pred_check_branch
      %9 = sbr.rel (0) target = $region5
    $region4: #{tpu_custom_call.1} parent=1 // pred_region
      _
    $region5: #{tpu_custom_call.1} parent=1 // pred_fallthru
      _
    // Predicated region
    $region6: #{tpu_custom_call.1} parent=1 // pred_check
      _
    $region7: #{tpu_custom_call.1} parent=1 // pred_check_branch
      %11 = sbr.rel (0) target = $region9
    $region8: #{tpu_custom_call.1} parent=1 // pred_region
      _
    $region9: #{tpu_custom_call.1} parent=1 // pred_fallthru
      _
    %v12 = vld [vmem:[%s0] sm:$0xff]
    %v13 = vld [vmem:[%s1] sm:$0xff]
    %14 = vmax.xlane.f32.xlu0 %v12
    %v15 = vpop.xlane.xlu0 %14
    %v16 = vsub.f32 %v12, %v15
    %v17 = vmul.f32 %v16, 1.442695
    %v18 = vpow.pop %v17
    %19 = vadd.xlane.f32.xlu0 %v18
    %v20 = vpop.xlane.xlu0 %19
    %v21 = vlog2.pop %v20
    %v22 = vmul.f32 %v21, 0.6931472
    %v23 = vadd.f32 %v22, %v15
    %v24 = vlaneseq
    %v25 = vand.u32 %v24, 127
    %26 = vset.pattern.permute.xlu0 0
    %27 = vperm.xlu0 %26, %v13
    %v28 = vpop.permute.xlu0 %27
    %vm29 = vcmp.eq.s32.totalorder %v25, %v28
    %v30 = vsel %vm29, %v12, 0.0
    %31 = vadd.xlane.f32.xlu0 %v30
    %v32 = vpop.xlane.xlu0 %31
    %v33 = vsub.f32 %v23, %v32
    %vm34 = vcmask 7168
    %v35 = vsel %vm34, %v33, 0.0
    %36 = vadd.xlane.f32.xlu0 %v35
    %v37 = vpop.xlane.xlu0 %36
    %v38 = vrot.slane %v37, 4
    %v39 = vadd.f32 %v37, %v38
    %v40 = vrot.slane %v39, 2
    %v41 = vadd.f32 %v39, %v40
    %v42 = vrot.slane %v41, 1
    %v43 = vadd.f32 %v41, %v42
    %s44 = vtos %v43
    %v45 = vstv %s44
    %46 = vst [vmem:[#allocation2] sm:$0xff] %v45
    // Predicated region
    $region10: #{tpu_custom_call.1} parent=1 // pred_check
      _
    $region11: #{tpu_custom_call.1} parent=1 // pred_check_branch
      %48 = sbr.rel (0) target = $region13
    $region12: #{tpu_custom_call.1} parent=1 // pred_region
      %s50 = ssub.s32 128, 128
      %51 = vsyncadd [#allocation3], %s50
      %s53 = sshll.u32 [#allocation2], 4
      %s54 = int_to_ptr.vmem [resolvable:$true] %s53
      %56 = dma.vmem_to_hbm [thread:$0]  %s54, 128, %s2, [#allocation3]
    $region13: #{tpu_custom_call.1} parent=1 // pred_fallthru
      _
    // Predicated region
    $region14: #{tpu_custom_call.1} parent=1 // pred_check
      _
    $region15: #{tpu_custom_call.1} parent=1 // pred_check_branch
      %58 = sbr.rel (0) target = $region17
    $region16: #{tpu_custom_call.1} parent=1 // pred_region
      %59 = dma.done [#allocation3], 128
    $region17: #{tpu_custom_call.1} parent=1 // pred_fallthru
      _
    %60 = vsyncpa [#allocation3], 1

</llo_original>
